<compile_context>
chip_gen: v5e
topology: v5e:2x2
jax: 0.10.0
libtpu: 0.0.40
codegen_flags: <defaults>
</compile_context>

<pallas_src>
import functools

import jax
import jax.numpy as jnp
from jax import lax
from jax.experimental import pallas as pl
from jax.experimental.pallas import tpu as pltpu


# ---------------------------------------------------------------------------
# Hardware / tiling helpers
# ---------------------------------------------------------------------------

_TARGET_BLOCK_BYTES = 2 << 20      # ~2 MiB blocks: HBM roofline already saturated
_MIN_PALLAS_BYTES = 256 << 10      # below this, plain jnp beats launch overhead
_HEADROOM_BYTES = 4 << 20


def _tpu_vmem_and_cores():
    """(VMEM capacity bytes, TensorCore count). Conservative defaults if unknown."""
    vmem, cores = 64 << 20, 2
    try:
        info = pltpu.get_tpu_info()
        vmem = int(getattr(info, "vmem_capacity_bytes", vmem)) or vmem
        for name in ("num_cores", "core_count", "num_tensorcores", "tensorcore_count"):
            v = getattr(info, name, None)
            if v:
                cores = int(v)
                break
    except Exception:
        pass
    return vmem, cores


def _padded_lanes(cols):
    return -(-cols // 128) * 128


def _pick_row_tile(rows, cols, itemsize, min_steps):
    """Row tile: ~2 MiB blocks, multiple of 8, with >= min_steps grid steps when
    the array is big enough to split."""
    per_row = _padded_lanes(cols) * itemsize          # account for lane padding
    tb = max(8, (_TARGET_BLOCK_BYTES // max(per_row, 1)) // 8 * 8)
    if rows >= min_steps * 8:
        tb = min(tb, max(8, (rows // min_steps) // 8 * 8))
    if rows <= tb:
        return rows                                    # full block (always legal)
    return tb


def _vmem_limit(block_bytes_total, vmem_cap):
    need = block_bytes_total + _HEADROOM_BYTES
    return int(min(max(need, 16 << 20), vmem_cap * 3 // 4))


def _rowwise_call(kernel, x, scalar_args=()):
    """Tiled (B, D) -> (B, D) call; rows map to sublanes, D (dim=-1) stays in-tile."""
    B, D = x.shape
    vmem_cap, cores = _tpu_vmem_and_cores()
    min_steps = 8 if cores >= 2 else 4
    tb = _pick_row_tile(B, D, x.dtype.itemsize, min_steps)
    grid = pl.cdiv(B, tb)
    block_bytes = tb * _padded_lanes(D) * x.dtype.itemsize

    if grid > 3:
        in_spec = pl.BlockSpec((tb, D), lambda i: (i, 0),
                               pipeline_mode=pl.Buffered(3))
        n_in_bufs = 3
    else:
        in_spec = pl.BlockSpec((tb, D), lambda i: (i, 0))
        n_in_bufs = 2
    out_spec = pl.BlockSpec((tb, D), lambda i: (i, 0))
    smem = pl.BlockSpec(memory_space=pltpu.MemorySpace.SMEM)

    return pl.pallas_call(
        kernel,
        grid=(grid,),
        in_specs=[smem] * len(scalar_args) + [in_spec],
        out_specs=out_spec,
        out_shape=jax.ShapeDtypeStruct((B, D), x.dtype),
        compiler_params=pltpu.CompilerParams(
            dimension_semantics=("parallel",),
            vmem_limit_bytes=_vmem_limit((n_in_bufs + 2) * block_bytes, vmem_cap)),
    )(*scalar_args, x)


# ---------------------------------------------------------------------------
# Kernels (residual flag and constants baked in at trace time)
# ---------------------------------------------------------------------------

def _double_kernel(x_ref, o_ref):
    x = x_ref[...]
    o_ref[...] = x + x                                   # identity + residual


def _clip_kernel(x_ref, o_ref, *, norm_to, res):
    x = x_ref[...]
    y = jnp.clip(x, -norm_to, norm_to)
    if res:
        y = y + x
    o_ref[...] = y


def _soft_clip_kernel(scaling_ref, radius_ref, x_ref, o_ref, *, res):
    x = x_ref[...]
    ssq = jnp.sum(x * x, axis=-1, keepdims=True)         # (tb, 1)
    ssq_c = jnp.maximum(ssq, 1e-14)                      # (norm clamp_min 1e-7)^2
    inv = lax.rsqrt(ssq_c)                               # 1 / clamped norm  (EUP)
    norm_c = ssq_c * inv                                 # clamped norm (reuses rsqrt)
    radius = jnp.clip(radius_ref[0], 1e-7, 1.0 - 1e-7)
    y = x * (jnp.tanh(norm_c * scaling_ref[0]) * (radius * inv))
    if res:
        y = y + x
    o_ref[...] = y


def _l2_kernel(radius_ref, x_ref, o_ref, *, norm_to, res):
    x = x_ref[...]
    ssq = jnp.sum(x * x, axis=-1, keepdims=True)
    inv = lax.rsqrt(jnp.maximum(ssq, 1e-14))             # == 1 / max(norm, 1e-7)
    soft_clamp = norm_to * jax.nn.sigmoid(radius_ref[0])
    y = x * (soft_clamp * inv) + 1e-7
    if res:
        y = y + x
    o_ref[...] = y


def _scale_down_fused_kernel(x_ref, o_ref, *, res):
    # Whole array resident: read once, global max of row sum-of-squares, scale, write.
    # NOTE: all-zero input gives rsqrt(0)=inf -> NaN/Inf, matching the reference x/0.
    x = x_ref[...]
    ssq = jnp.sum(x * x, axis=-1, keepdims=True)
    inv = lax.rsqrt(jnp.max(ssq))
    y = x * inv
    if res:
        y = y + x
    o_ref[...] = y


def _tile_max_ssq_kernel(x_ref, m_ref, *, tb, rows):
    # scale_down pass 1: per-tile partial max of row sum-of-squares ("parallel" grid).
    i = pl.program_id(0)
    x = x_ref[...]
    ssq = jnp.sum(x * x, axis=-1, keepdims=True)          # (tb, 1)
    row = lax.broadcasted_iota(jnp.int32, ssq.shape, 0) + i * tb
    ssq = jnp.where(row < rows, ssq, 0.0)                 # mask padded tail rows
    m_ref[...] = jnp.zeros_like(m_ref) + jnp.max(ssq)     # broadcast into (8,128) block


def _scale_kernel(mssq_ref, x_ref, o_ref, *, res):
    # scale_down pass 2: rsqrt folded into the kernel (one scalar EUP op per step).
    inv = lax.rsqrt(mssq_ref[0])
    x = x_ref[...]
    y = x * inv
    if res:
        y = y + x
    o_ref[...] = y


# ---------------------------------------------------------------------------
# scale_down dispatch (fused single pass vs. two-pass)
# ---------------------------------------------------------------------------

def _scale_down(x, res, *, force_two_pass=False):
    B, D = x.shape
    vmem_cap, cores = _tpu_vmem_and_cores()
    array_bytes = B * _padded_lanes(D) * x.dtype.itemsize

    # Fused path: x resident in VMEM (allow for 2x in + 2x out buffering) -> 2x HBM traffic.
    fits = 4 * array_bytes + 2 * _HEADROOM_BYTES <= vmem_cap * 3 // 4
    if fits and not force_two_pass:
        spec = pl.BlockSpec((B, D), lambda i: (0, 0))
        return pl.pallas_call(
            functools.partial(_scale_down_fused_kernel, res=res),
            grid=(1,),
            in_specs=[spec],
            out_specs=spec,
            out_shape=jax.ShapeDtypeStruct((B, D), x.dtype),
            compiler_params=pltpu.CompilerParams(
                dimension_semantics=("arbitrary",),
                vmem_limit_bytes=_vmem_limit(4 * array_bytes, vmem_cap)),
        )(x)

    # Two-pass path (array too big to keep resident).
    min_steps = 8 if cores >= 2 else 4
    tb = _pick_row_tile(B, D, x.dtype.itemsize, min_steps)
    grid = pl.cdiv(B, tb)
    block_bytes = tb * _padded_lanes(D) * x.dtype.itemsize
    if grid > 3:
        in_spec = pl.BlockSpec((tb, D), lambda i: (i, 0),
                               pipeline_mode=pl.Buffered(3))
        n_in_bufs = 3
    else:
        in_spec = pl.BlockSpec((tb, D), lambda i: (i, 0))
        n_in_bufs = 2

    # Pass 1: per-tile partial maxes, "parallel" so both v7x TCs stream HBM.
    partials = pl.pallas_call(
        functools.partial(_tile_max_ssq_kernel, tb=tb, rows=B),
        grid=(grid,),
        in_specs=[in_spec],
        out_specs=pl.BlockSpec((8, 128), lambda i: (i, 0)),
        out_shape=jax.ShapeDtypeStruct((grid * 8, 128), jnp.float32),
        compiler_params=pltpu.CompilerParams(
            dimension_semantics=("parallel",),
            vmem_limit_bytes=_vmem_limit(n_in_bufs * block_bytes + (1 << 20), vmem_cap)),
    )(x)

    # Tiny wrapper-side reduce of the partials; rsqrt happens inside pass 2.
    mssq = jnp.max(partials).astype(jnp.float32).reshape(1)

    # Pass 2: tiled elementwise scale.
    return _rowwise_call(functools.partial(_scale_kernel, res=res), x,
                         scalar_args=(mssq,))


# ---------------------------------------------------------------------------
# Wrapper (equivalent of LayerCommon.forward)
# ---------------------------------------------------------------------------

def layer_common_forward(x, *, norm_type=None, norm_to=1.0, residual=False,
                         params=None, min_pallas_bytes=_MIN_PALLAS_BYTES,
                         force_scale_down_two_pass=False):
    """Pallas implementation of LayerCommon.forward for 2-D inputs (B, D)."""
    res = bool(residual)
    B, D = x.shape

    if norm_type is None and not res:
        return x                                         # pure identity

    # Small-input fallback: fixed pallas_call overhead dominates below ~256 KiB.
    if B * D * x.dtype.itemsize < min_pallas_bytes:
        return layer_common_ref(x, norm_type=norm_type, norm_to=norm_to,
                                residual=residual, params=params)

    if norm_type is None:
        return _rowwise_call(_double_kernel, x)           # x + x

    if norm_type == "clip":
        kernel = functools.partial(_clip_kernel, norm_to=float(norm_to), res=res)
        return _rowwise_call(kernel, x)

    if norm_type == "soft_clip":
        kernel = functools.partial(_soft_clip_kernel, res=res)
        return _rowwise_call(kernel, x,
                             scalar_args=(params["scaling"], params["radius"]))

    if norm_type == "l2":
        kernel = functools.partial(_l2_kernel, norm_to=float(norm_to), res=res)
        return _rowwise_call(kernel, x, scalar_args=(params["radius"],))

    if norm_type == "scale_down":
        return _scale_down(x, res, force_two_pass=force_scale_down_two_pass)

    raise ValueError(f"unknown norm_type: {norm_type}")


# ---------------------------------------------------------------------------
# Pure-JAX reference (mirrors the PyTorch code) for verification / fallback
# ---------------------------------------------------------------------------

def layer_common_ref(x, *, norm_type=None, norm_to=1.0, residual=False,
                     params=None):
    res = int(bool(residual))
    if norm_type is None:
        y = x
    elif norm_type == "clip":
        y = jnp.clip(x, -norm_to, norm_to)
    elif norm_type == "soft_clip":
        norm = jnp.maximum(jnp.linalg.norm(x, axis=-1, keepdims=True), 1e-7)
        radius = jnp.clip(params["radius"][0], 1e-7, 1.0 - 1e-7)
        y = x / norm * jnp.tanh(norm * params["scaling"][0]) * radius
    elif norm_type == "l2":
        norm = jnp.linalg.norm(x, axis=-1, keepdims=True)
        normalized = x / jnp.maximum(norm, 1e-7)
        y = normalized * (norm_to * jax.nn.sigmoid(params["radius"][0])) + 1e-7
    elif norm_type == "scale_down":
        y = x / jnp.max(jnp.linalg.norm(x, axis=-1))
    else:
        raise ValueError(norm_type)
    return y + x * res


# ---------------------------------------------------------------------------
# Main
# ---------------------------------------------------------------------------

if __name__ == "__main__":
    key = jax.random.PRNGKey(0)

    soft_clip_params = {
        "scaling": jnp.array([1.0 - 0.01], dtype=jnp.float32),   # (1,)
        "radius": jnp.array([1.0 - 0.01], dtype=jnp.float32),    # (1,)
    }
    l2_params = {"radius": jnp.array([0.01], dtype=jnp.float32)}  # (1,)

    configs = [
        dict(norm_type=None, norm_to=1.0, residual=False, params=None),
        dict(norm_type=None, norm_to=1.0, residual=True, params=None),
        dict(norm_type="clip", norm_to=1.0, residual=True, params=None),
        dict(norm_type="soft_clip", norm_to=1.0, residual=False,
             params=soft_clip_params),
        dict(norm_type="soft_clip", norm_to=1.0, residual=True,
             params=soft_clip_params),
        dict(norm_type="l2", norm_to=1.0, residual=True, params=l2_params),
        dict(norm_type="scale_down", norm_to=1.0, residual=False, params=None),
        dict(norm_type="scale_down", norm_to=1.0, residual=True, params=None),
    ]

    # (16, 32): single-block path.  (512, 256): multi-step grid with Buffered(3).
    for (B, D) in [(16, 32), (512, 256)]:
        x = jax.random.normal(jax.random.fold_in(key, B * 1000 + D),
                              (B, D), dtype=jnp.float32) * 2.0
        for cfg in configs:
            out = layer_common_forward(x, min_pallas_bytes=0, **cfg)
            out = jax.block_until_ready(out)
            ref = layer_common_ref(x, **cfg)
            assert out.shape == x.shape and out.dtype == x.dtype
            assert jnp.allclose(out, ref, rtol=1e-5, atol=1e-6), (cfg["norm_type"], B, D)

    # Explicitly exercise the two-pass scale_down path (normally only used for
    # arrays too large to keep resident in VMEM).
    x = jax.random.normal(key, (512, 256), dtype=jnp.float32) * 2.0
    out = layer_common_forward(x, norm_type="scale_down", residual=True,
                               min_pallas_bytes=0, force_scale_down_two_pass=True)
    ref = layer_common_ref(x, norm_type="scale_down", residual=True)
    assert jnp.allclose(jax.block_until_ready(out), ref, rtol=1e-5, atol=1e-6)

    # Small-input jnp fallback (default dispatch).
    x_small = jax.random.normal(key, (16, 32), dtype=jnp.float32)
    out = layer_common_forward(x_small, norm_type="clip", norm_to=1.0, residual=True)
    ref = layer_common_ref(x_small, norm_type="clip", norm_to=1.0, residual=True)
    assert jnp.allclose(jax.block_until_ready(out), ref, rtol=1e-5, atol=1e-6)

    print("KERNEL_OK")
</pallas_src>

<mosaic_0001>
module attributes {stable_mosaic.version = 11 : i64} {
  func.func @_double_kernel(%arg0: i32, %arg1: memref<16x32xf32, #tpu.memory_space<vmem>>, %arg2: memref<16x32xf32, #tpu.memory_space<vmem>>) attributes {dimension_semantics = [#tpu.dimension_semantics<parallel>], iteration_bounds = array<i64: 1>, scalar_prefetch = 0 : i64, scratch_operands = 0 : i64, tpu.core_type = #tpu.core_type<tc>, window_params = [{transform_indices = @transform_0, window_bounds = array<i64: 16, 32>}, {transform_indices = @transform_1, window_bounds = array<i64: 16, 32>}]} {
    %c0 = arith.constant 0 : index
    %c0_0 = arith.constant 0 : index
    %0 = vector.load %arg1[%c0, %c0_0] : memref<16x32xf32, #tpu.memory_space<vmem>>, vector<16x32xf32>
    %1 = arith.addf %0, %0 : vector<16x32xf32>
    %c0_1 = arith.constant 0 : index
    %c0_2 = arith.constant 0 : index
    %2 = vector.load %arg2[%c0_1, %c0_2] : memref<16x32xf32, #tpu.memory_space<vmem>>, vector<16x32xf32>
    tpu.vector_store %arg2[%c0_1, %c0_2], %1 {strides = array<i32>} : memref<16x32xf32, #tpu.memory_space<vmem>>, vector<16x32xf32>,
    return
  }
  func.func @transform_0(%arg0: i32) -> (i32, i32) {
    %c0_i32 = arith.constant 0 : i32
    %c0_i32_0 = arith.constant 0 : i32
    return %arg0, %c0_i32 : i32, i32
  }
  func.func @transform_1(%arg0: i32) -> (i32, i32) {
    %c0_i32 = arith.constant 0 : i32
    %c0_i32_0 = arith.constant 0 : i32
    return %arg0, %c0_i32 : i32, i32
  }
}

</mosaic_0001>

<llo_original>
// kernel: tpu_custom_call.1
$region0: #{tpu_custom_call.1}
  #allocation0 [shape = 'u32[]', space=smem, size = 0x4, offset = 0x4, fixed_abs, tag = 'smem constant byte address 0x4 - core index']
  #allocation1 [shape = 'u32[72,128]{1,0:T(1,128)}', space=vmem, size = 0x9000, scoped, tag = 'internal scratch']
  %s0 = inlined_call_operand.hbm [shape: f32[16,32], index: 0, kind: input, shape index: {}]
  %s1 = inlined_call_operand.hbm [shape: f32[16,32], index: 1, kind: output, shape index: {}]
  %s2 = sld [smem:[#allocation0]]
  $region18: #{tpu_custom_call.1} parent=0
    _
  %s4 = ssub.s32 1, %s2
  %s5 = scalar_select 0, %s4, %s2
  $region1: #{tpu_custom_call.1} parent=0
    #allocation2 [shape = 'u8[8192]{0}', space=vmem, size = 0x2000, scoped, tag = 'input window, operand 0, single buffered']
    #allocation3 [shape = 's32[1]{0}', space=sflag, size = 0x4, scoped, tag = 'scoped memory for tpu_custom_call.1']
    #allocation4 [shape = 's32[1]{0}', space=sflag, size = 0x4, scoped, tag = 'scoped memory for tpu_custom_call.1']
    #allocation5 [shape = 'u8[8192]{0}', space=vmem, size = 0x2000, scoped, tag = 'output window, operand 0, single buffered']
    %6 = vsyncpa [#allocation3], 0
    %7 = vsyncpa [#allocation4], 0
    // Predicated region
    $region2: #{tpu_custom_call.1} parent=1 // pred_check
      _
    $region3: #{tpu_custom_call.1} parent=1 // pred_check_branch
      %9 = sbr.rel (0) target = $region5
    $region4: #{tpu_custom_call.1} parent=1 // pred_region
      %11 = vsyncadd [#allocation3], 0
      %s12 = sshll.u32 %s0, 4
      %s13 = int_to_ptr.hbm [resolvable:$true] %s12
      %s14 = sshll.u32 [#allocation2], 4
      %s15 = int_to_ptr.vmem [resolvable:$true] %s14
      %20 = dma.hbm_to_vmem [thread:$0]  %s13, 256, %s15, [#allocation3], 128, 128, 8
    $region5: #{tpu_custom_call.1} parent=1 // pred_fallthru
      _
    // Predicated region
    $region6: #{tpu_custom_call.1} parent=1 // pred_check
      _
    $region7: #{tpu_custom_call.1} parent=1 // pred_check_branch
      %22 = sbr.rel (0) target = $region9
    $region8: #{tpu_custom_call.1} parent=1 // pred_region
      %24 = dma.done [#allocation3], 256
    $region9: #{tpu_custom_call.1} parent=1 // pred_fallthru
      _
    %v25 = vld [vmem:[#allocation2] sm:$0xff]
    %v26 = vld [vmem:[#allocation2 + $0x8] sm:$0xff]
    %v27 = vadd.f32 %v25, %v25
    %v28 = vadd.f32 %v26, %v26
    %vm29 = vcmask 261120
    %30 = vst.msk [vmem:[#allocation5] sm:$0xff] %vm29, %v27
    %31 = vst.msk [vmem:[#allocation5 + $0x8] sm:$0xff] %vm29, %v28
    // Predicated region
    $region10: #{tpu_custom_call.1} parent=1 // pred_check
      _
    $region11: #{tpu_custom_call.1} parent=1 // pred_check_branch
      %33 = sbr.rel (0) target = $region13
    $region12: #{tpu_custom_call.1} parent=1 // pred_region
      %35 = vsyncadd [#allocation4], 0
      %s36 = sshll.u32 [#allocation5], 4
      %s37 = int_to_ptr.vmem [resolvable:$true] %s36
      %s38 = sshll.u32 %s1, 4
      %s39 = int_to_ptr.hbm [resolvable:$true] %s38
      %44 = dma.vmem_to_hbm [thread:$0]  %s37, 256, %s39, [#allocation4], 128, 128, 8
    $region13: #{tpu_custom_call.1} parent=1 // pred_fallthru
      _
    // Predicated region
    $region14: #{tpu_custom_call.1} parent=1 // pred_check
      _
    $region15: #{tpu_custom_call.1} parent=1 // pred_check_branch
      %46 = sbr.rel (0) target = $region17
    $region16: #{tpu_custom_call.1} parent=1 // pred_region
      %48 = dma.done [#allocation4], 256
    $region17: #{tpu_custom_call.1} parent=1 // pred_fallthru
      _
    %49 = vsyncpa [#allocation3], 1
    %50 = vsyncpa [#allocation4], 1

</llo_original>
